<compile_context>
chip_gen: v7x
topology: tpu7x:2x2x1
jax: 0.10.0
libtpu: 0.0.40
codegen_flags: <defaults>
</compile_context>

<pallas_src>
import functools

import jax
import jax.numpy as jnp
from jax.experimental import pallas as pl
from jax.experimental.pallas import tpu as pltpu


def _mvcnn_fused_kernel(x_ref, w1_ref, b1_ref, fcw_ref, fcb_ref, o_ref,
                        acc_ref, *, num_views):
    """Fused MVCNN forward, one grid step per (batch, view).

    x_ref   : (1, 1, C, HW) one view, channels-first, spatial flattened
    w1_ref  : (F, C)  bf16  backbone 1x1-conv weight (PyTorch conv layout)
    b1_ref  : (F, 1)  f32   backbone bias (broadcasts over HW lanes)
    fcw_ref : (Z, F)  bf16  net_2 fc weight (PyTorch nn.Linear layout)
    fcb_ref : (Z, 1)  f32   net_2 fc bias
    o_ref   : (1, 1, Z) f32 output row for this batch
    acc_ref : (F, 1)  f32   VMEM scratch: running view-max (column space)
    """
    v = pl.program_id(1)

    # Backbone trunk stand-in: 1x1 conv on the MXU (bf16 operands, f32 acc),
    # bias + ReLU on the VPU.
    xv = x_ref[0, 0].astype(jnp.bfloat16)                       # (C, HW)
    h = jnp.dot(w1_ref[...], xv,
                preferred_element_type=jnp.float32)             # (F, HW) f32
    h = jnp.maximum(h + b1_ref[...], 0.0)

    # Global avg-pool: lane-axis reduction, stays an (F, 1) column (no relayout).
    pooled = jnp.sum(h, axis=-1, keepdims=True) * (1.0 / h.shape[-1])

    # View-max accumulator in column space (elementwise, VPU).
    @pl.when(v == 0)
    def _init():
        acc_ref[...] = pooled

    @pl.when(v > 0)
    def _update():
        acc_ref[...] = jnp.maximum(acc_ref[...], pooled)

    # Finalize: net_2 fc + store, once per batch.
    @pl.when(v == num_views - 1)
    def _finalize():
        feats = acc_ref[...].astype(jnp.bfloat16)               # (F, 1)
        out_col = (jnp.dot(fcw_ref[...], feats,
                           preferred_element_type=jnp.float32)
                   + fcb_ref[...])                              # (Z, 1)
        # Single tiny (Z,1)->(1,Z) relayout per batch (not per view).
        o_ref[0] = out_col.T


def mvcnn_forward(x_nchw, num_views, w1, b1, fc_w, fc_b):
    BV, C, H, W = x_nchw.shape
    assert BV % num_views == 0, "batch*views must be divisible by num_views"
    B = BV // num_views
    HW = H * W
    F = w1.shape[0]
    Z = fc_w.shape[0]

    # Free, contiguous reshapes (PyTorch .view semantics): NCHW -> (B, V, C, HW).
    x_blocks = x_nchw.reshape(B, num_views, C, HW)
    # bf16 matmul operands for MXU peak; biases stay f32.
    w1_b = w1.astype(jnp.bfloat16)
    fcw_b = fc_w.astype(jnp.bfloat16)          # (Z, F), nn.Linear layout
    b1c = b1.reshape(F, 1).astype(jnp.float32)
    fcb = fc_b.reshape(Z, 1).astype(jnp.float32)

    kernel = functools.partial(_mvcnn_fused_kernel, num_views=num_views)

    out = pl.pallas_call(
        kernel,
        out_shape=jax.ShapeDtypeStruct((B, 1, Z), jnp.float32),
        grid=(B, num_views),
        in_specs=[
            pl.BlockSpec((1, 1, C, HW), lambda b, v: (b, v, 0, 0)),
            pl.BlockSpec((F, C), lambda b, v: (0, 0)),
            pl.BlockSpec((F, 1), lambda b, v: (0, 0)),
            pl.BlockSpec((Z, F), lambda b, v: (0, 0)),
            pl.BlockSpec((Z, 1), lambda b, v: (0, 0)),
        ],
        out_specs=pl.BlockSpec((1, 1, Z), lambda b, v: (b, 0, 0)),
        scratch_shapes=[pltpu.VMEM((F, 1), jnp.float32)],
        compiler_params=pltpu.CompilerParams(
            # batch axis -> 2 TCs on v7x; view axis carries the accumulator.
            dimension_semantics=("parallel", "arbitrary"),
            vmem_limit_bytes=32 * 1024 * 1024,
        ),
    )(x_blocks, w1_b, b1c, fcw_b, fcb)
    return out.reshape(B, Z)


if __name__ == "__main__":
    key = jax.random.PRNGKey(0)
    B, V = 2, 2                 # real batch = 2, num_views = 2  -> B*V = 4
    C, H, W = 4, 16, 16         # small NCHW input
    F, Z = 128, 32              # backbone feature dim, z_dim

    k1, k2, k3, k4, k5 = jax.random.split(key, 5)
    x = jax.random.normal(k1, (B * V, C, H, W), jnp.float32)
    w1 = jax.random.normal(k2, (F, C), jnp.float32) * 0.1    # 1x1 conv weight (F, C)
    b1 = jax.random.normal(k3, (F,), jnp.float32) * 0.1
    fc_w = jax.random.normal(k4, (Z, F), jnp.float32) * 0.1  # nn.Linear weight (Z, F)
    fc_b = jax.random.normal(k5, (Z,), jnp.float32) * 0.1

    fwd = jax.jit(mvcnn_forward, static_argnums=1)
    out = fwd(x, V, w1, b1, fc_w, fc_b)
    out = jax.block_until_ready(out)
    assert out.shape == (B, Z)

    # pure-JAX f32 reference of the same forward (kernel uses bf16 MXU operands
    # with f32 accumulation, hence the loosened tolerance).
    xr = jnp.transpose(x, (0, 2, 3, 1)).reshape(B * V, H * W, C)
    hr = jnp.einsum("bpc,fc->bpf", xr, w1) + b1[None, None, :]
    fr = jnp.mean(jnp.maximum(hr, 0.0), axis=1)              # (B*V, F)
    pooled = jnp.max(fr.reshape(B, V, F), axis=1)            # (B, F)  view-max
    ref = pooled @ fc_w.T + fc_b[None, :]
    assert jnp.allclose(out, ref, atol=2e-2, rtol=2e-2), "kernel/reference mismatch"

    print("KERNEL_OK")
</pallas_src>

<mosaic_0001>
module attributes {stable_mosaic.version = 11 : i64} {
  func.func @_mvcnn_fused_kernel(%arg0: i32, %arg1: i32, %arg2: memref<1x1x4x256xf32, #tpu.memory_space<vmem>>, %arg3: memref<128x4xbf16, #tpu.memory_space<vmem>>, %arg4: memref<128x1xf32, #tpu.memory_space<vmem>>, %arg5: memref<32x128xbf16, #tpu.memory_space<vmem>>, %arg6: memref<32x1xf32, #tpu.memory_space<vmem>>, %arg7: memref<1x1x32xf32, #tpu.memory_space<vmem>>, %arg8: memref<128x1xf32, #tpu.memory_space<vmem>>) attributes {dimension_semantics = [#tpu.dimension_semantics<parallel>, #tpu.dimension_semantics<arbitrary>], iteration_bounds = array<i64: 2, 2>, scalar_prefetch = 0 : i64, scratch_operands = 1 : i64, tpu.core_type = #tpu.core_type<tc>, window_params = [{transform_indices = @transform_0, window_bounds = array<i64: 1, 1, 4, 256>}, {pipeline_mode = #tpu.pipeline_mode<synchronous>, transform_indices = @transform_1, window_bounds = array<i64: 128, 4>}, {pipeline_mode = #tpu.pipeline_mode<synchronous>, transform_indices = @transform_2, window_bounds = array<i64: 128, 1>}, {pipeline_mode = #tpu.pipeline_mode<synchronous>, transform_indices = @transform_3, window_bounds = array<i64: 32, 128>}, {pipeline_mode = #tpu.pipeline_mode<synchronous>, transform_indices = @transform_4, window_bounds = array<i64: 32, 1>}, {transform_indices = @transform_5, window_bounds = array<i64: 1, 1, 32>}]} {
    %c0 = arith.constant 0 : index
    %c0_0 = arith.constant 0 : index
    %c0_1 = arith.constant 0 : index
    %c0_2 = arith.constant 0 : index
    %0 = vector.load %arg2[%c0, %c0_0, %c0_1, %c0_2] : memref<1x1x4x256xf32, #tpu.memory_space<vmem>>, vector<1x1x4x256xf32>
    %1 = vector.shape_cast %0 : vector<1x1x4x256xf32> to vector<4x256xf32>
    %2 = arith.truncf %1 : vector<4x256xf32> to vector<4x256xbf16>
    %c0_3 = arith.constant 0 : index
    %c0_4 = arith.constant 0 : index
    %3 = vector.load %arg3[%c0_3, %c0_4] : memref<128x4xbf16, #tpu.memory_space<vmem>>, vector<128x4xbf16>
    %cst = arith.constant dense<0.000000e+00> : vector<128x256xf32>
    %4 = tpu.matmul %3, %2, %cst {dimension_numbers = #tpu.dot_dimension_numbers<[1], [0], [0], [1], [0, 0, 1, 1], [], []>} : vector<128x4xbf16>, vector<4x256xbf16>, vector<128x256xf32> -> vector<128x256xf32>
    %c0_5 = arith.constant 0 : index
    %c0_6 = arith.constant 0 : index
    %5 = vector.load %arg4[%c0_5, %c0_6] : memref<128x1xf32, #tpu.memory_space<vmem>>, vector<128x1xf32>
    %6 = vector.broadcast %5 : vector<128x1xf32> to vector<128x256xf32>
    %7 = arith.addf %4, %6 : vector<128x256xf32>
    %cst_7 = arith.constant 0.000000e+00 : f32
    %8 = vector.broadcast %cst_7 : f32 to vector<128x256xf32>
    %9 = arith.maximumf %7, %8 : vector<128x256xf32>
    %cst_8 = arith.constant dense<0.000000e+00> : vector<128xf32>
    %10 = vector.multi_reduction <add>, %9, %cst_8 [1] : vector<128x256xf32> to vector<128xf32>
    %11 = vector.shape_cast %10 : vector<128xf32> to vector<128x1xf32>
    %cst_9 = arith.constant 3.906250e-03 : f32
    %12 = vector.broadcast %cst_9 : f32 to vector<128x1xf32>
    %13 = arith.mulf %11, %12 : vector<128x1xf32>
    %c0_i32 = arith.constant 0 : i32
    %14 = arith.cmpi eq, %arg1, %c0_i32 : i32
    %15 = arith.extui %14 : i1 to i32
    %c0_i32_10 = arith.constant 0 : i32
    %16 = arith.cmpi ne, %15, %c0_i32_10 : i32
    scf.if %16 {
      %c0_14 = arith.constant 0 : index
      %c0_15 = arith.constant 0 : index
      %23 = vector.load %arg8[%c0_14, %c0_15] : memref<128x1xf32, #tpu.memory_space<vmem>>, vector<128x1xf32>
      tpu.vector_store %arg8[%c0_14, %c0_15], %13 {strides = array<i32>} : memref<128x1xf32, #tpu.memory_space<vmem>>, vector<128x1xf32>,
    } else {
    }
    %c0_i32_11 = arith.constant 0 : i32
    %17 = arith.cmpi sgt, %arg1, %c0_i32_11 : i32
    %18 = arith.extui %17 : i1 to i32
    %c0_i32_12 = arith.constant 0 : i32
    %19 = arith.cmpi ne, %18, %c0_i32_12 : i32
    scf.if %19 {
      %c0_14 = arith.constant 0 : index
      %c0_15 = arith.constant 0 : index
      %23 = vector.load %arg8[%c0_14, %c0_15] : memref<128x1xf32, #tpu.memory_space<vmem>>, vector<128x1xf32>
      %24 = arith.maximumf %23, %13 : vector<128x1xf32>
      %c0_16 = arith.constant 0 : index
      %c0_17 = arith.constant 0 : index
      %25 = vector.load %arg8[%c0_16, %c0_17] : memref<128x1xf32, #tpu.memory_space<vmem>>, vector<128x1xf32>
      tpu.vector_store %arg8[%c0_16, %c0_17], %24 {strides = array<i32>} : memref<128x1xf32, #tpu.memory_space<vmem>>, vector<128x1xf32>,
    } else {
    }
    %c1_i32 = arith.constant 1 : i32
    %20 = arith.cmpi eq, %arg1, %c1_i32 : i32
    %21 = arith.extui %20 : i1 to i32
    %c0_i32_13 = arith.constant 0 : i32
    %22 = arith.cmpi ne, %21, %c0_i32_13 : i32
    scf.if %22 {
      %c0_14 = arith.constant 0 : index
      %c0_15 = arith.constant 0 : index
      %23 = vector.load %arg8[%c0_14, %c0_15] : memref<128x1xf32, #tpu.memory_space<vmem>>, vector<128x1xf32>
      %24 = arith.truncf %23 : vector<128x1xf32> to vector<128x1xbf16>
      %c0_16 = arith.constant 0 : index
      %c0_17 = arith.constant 0 : index
      %25 = vector.load %arg5[%c0_16, %c0_17] : memref<32x128xbf16, #tpu.memory_space<vmem>>, vector<32x128xbf16>
      %cst_18 = arith.constant dense<0.000000e+00> : vector<32x1xf32>
      %26 = tpu.matmul %25, %24, %cst_18 {dimension_numbers = #tpu.dot_dimension_numbers<[1], [0], [0], [1], [0, 0, 1, 1], [], []>} : vector<32x128xbf16>, vector<128x1xbf16>, vector<32x1xf32> -> vector<32x1xf32>
      %c0_19 = arith.constant 0 : index
      %c0_20 = arith.constant 0 : index
      %27 = vector.load %arg6[%c0_19, %c0_20] : memref<32x1xf32, #tpu.memory_space<vmem>>, vector<32x1xf32>
      %28 = arith.addf %26, %27 : vector<32x1xf32>
      %29 = tpu.transpose %28, [1, 0] : vector<32x1xf32> -> vector<1x32xf32>
      %c0_21 = arith.constant 0 : index
      %c0_22 = arith.constant 0 : index
      %c0_23 = arith.constant 0 : index
      %30 = vector.load %arg7[%c0_21, %c0_22, %c0_23] : memref<1x1x32xf32, #tpu.memory_space<vmem>>, vector<1x1x32xf32>
      %31 = vector.shape_cast %30 : vector<1x1x32xf32> to vector<1x32xf32>
      %32 = vector.shape_cast %29 : vector<1x32xf32> to vector<1x1x32xf32>
      tpu.vector_store %arg7[%c0_21, %c0_22, %c0_23], %32 {strides = array<i32>} : memref<1x1x32xf32, #tpu.memory_space<vmem>>, vector<1x1x32xf32>,
    } else {
    }
    return
  }
  func.func @transform_0(%arg0: i32, %arg1: i32) -> (i32, i32, i32, i32) {
    %c0_i32 = arith.constant 0 : i32
    %c0_i32_0 = arith.constant 0 : i32
    %c0_i32_1 = arith.constant 0 : i32
    return %arg0, %arg1, %c0_i32, %c0_i32_0 : i32, i32, i32, i32
  }
  func.func @transform_1(%arg0: i32, %arg1: i32) -> (i32, i32) {
    %c0_i32 = arith.constant 0 : i32
    %c0_i32_0 = arith.constant 0 : i32
    %c0_i32_1 = arith.constant 0 : i32
    return %c0_i32, %c0_i32_0 : i32, i32
  }
  func.func @transform_2(%arg0: i32, %arg1: i32) -> (i32, i32) {
    %c0_i32 = arith.constant 0 : i32
    %c0_i32_0 = arith.constant 0 : i32
    %c0_i32_1 = arith.constant 0 : i32
    return %c0_i32, %c0_i32_0 : i32, i32
  }
  func.func @transform_3(%arg0: i32, %arg1: i32) -> (i32, i32) {
    %c0_i32 = arith.constant 0 : i32
    %c0_i32_0 = arith.constant 0 : i32
    %c0_i32_1 = arith.constant 0 : i32
    return %c0_i32, %c0_i32_0 : i32, i32
  }
  func.func @transform_4(%arg0: i32, %arg1: i32) -> (i32, i32) {
    %c0_i32 = arith.constant 0 : i32
    %c0_i32_0 = arith.constant 0 : i32
    %c0_i32_1 = arith.constant 0 : i32
    return %c0_i32, %c0_i32_0 : i32, i32
  }
  func.func @transform_5(%arg0: i32, %arg1: i32) -> (i32, i32, i32) {
    %c0_i32 = arith.constant 0 : i32
    %c0_i32_0 = arith.constant 0 : i32
    %c0_i32_1 = arith.constant 0 : i32
    return %arg0, %c0_i32, %c0_i32_0 : i32, i32, i32
  }
}

</mosaic_0001>

<llo_original>
// kernel: mvcnn_forward.1
$region0: #{mvcnn_forward.1}
  #allocation0 [shape = 'u32[]', space=smem, size = 0x4, offset = 0x4, fixed_abs, tag = 'smem constant byte address 0x4 - core index']
  #allocation1 [shape = 'u32[144,128]{1,0:T(1,128)}', space=vmem, size = 0x12000, scoped, tag = 'internal scratch']
  #allocation2 [shape = 'f32[128,1]{1,0:T(8,128)}', space=vmem, size = 0x10000, scoped, tag = 'scratch operand']
  %s0 = inlined_call_operand.vmem [shape: f32[2,2,4,256], index: 0, kind: input, shape index: {}]
  %s1 = inlined_call_operand.vmem [shape: bf16[128,4], index: 1, kind: input, shape index: {}]
  %s2 = inlined_call_operand.vmem [shape: f32[128,1], index: 2, kind: input, shape index: {}]
  %s3 = inlined_call_operand.vmem [shape: bf16[32,128], index: 3, kind: input, shape index: {}]
  %s4 = inlined_call_operand.vmem [shape: f32[32,1], index: 4, kind: input, shape index: {}]
  %s5 = inlined_call_operand.hbm [shape: f32[2,1,32], index: 5, kind: output, shape index: {}]
  %s6 = sld [smem:[#allocation0]]
  $region65: #{mvcnn_forward.1} parent=0
    _
  %s8 = ssub.s32 1, %s6
  %s9 = scalar_select 0, %s8, %s6
  $region1: #{mvcnn_forward.1} parent=0
    #allocation3 [shape = 'u8[1024]{0}', space=vmem, size = 0x400, scoped, tag = 'output window, operand 0']
    #allocation4 [shape = 's32[2]{0}', space=sflag, size = 0x8, scoped, tag = 'scoped memory for mvcnn_forward.1']
    %10 = vsyncpa [#allocation4], 0
    %s11 = scalar_lea.sflag [#allocation4], 1
    %12 = vsyncpa %s11, 0
    loop: start=0, step=1, limit=6
    $region2: #{mvcnn_forward.1} parent=1 // loop_pre_header
      _
    $region3: #{mvcnn_forward.1} parent=1 // loop_header
      %s14 = sphi 0, %s18
      %p15 = scmp.ge.s32.totalorder %s14, 6
      %s21 = sphi 0, %s33
      %s22 = sphi 0, %s29
      %s23 = sphi 0, %s21
      %s24 = sphi 0, %s22
      %s25 = sphi 0, %s23
      %s26 = sphi 0, %s24
      %s38 = sphi 0, %s40
      %s41 = sphi 0, %s38
      %s42 = sphi 0, %s41
      %s58 = sphi 0, %s42
      %s62 = sphi 0, %s62
      %s64 = sphi 0, %s62
      %s65 = sphi 0, %s64
      %s79 = sphi 0, %s65
      %s83 = sphi 0, %s83
      %s85 = sphi 0, %s83
      %s86 = sphi 0, %s85
      %s100 = sphi 0, %s86
      %s104 = sphi 0, %s104
      %s106 = sphi 0, %s104
      %s107 = sphi 0, %s106
      %s121 = sphi 0, %s107
      %s125 = sphi 0, %s125
      %s127 = sphi 0, %s125
      %s128 = sphi 0, %s127
      %s142 = sphi 0, %s128
      %s148 = sphi 0, %s150
      %s151 = sphi 0, %s148
      %s152 = sphi 0, %s151
      %s168 = sphi 0, %s152
    $region4: #{mvcnn_forward.1} parent=1 // loop_header_branch
      %17 = sbr.rel (%p15) target = $region8
    $region5: #{mvcnn_forward.1} parent=1 // loop_body
      %s19 = ssub.s32 %s14, 1
      %s20 = ssub.s32 %s14, 2
      %s27 = sadd.s32 1, %s22
      %p28 = scmp.ge.s32.totalorder %s27, 2
      %s29 = scalar_select %p28, 0, %s27
      %s30 = sadd.s32 1, %s21
      %s31 = scalar_select %p28, %s30, %s21
      %p32 = scmp.ge.s32.totalorder %s31, 2
      %s33 = scalar_select %p32, 0, %s31
      %s34 = ssub.s32 %s21, %s33
      %s35 = ssub.s32 %s22, %s29
      %s36 = sor.u32 %s34, %s35
      %p37 = scmp.eq.s32.totalorder %s36, 0
      %s39 = sadd.s32 %s38, 1
      %s40 = scalar_select %p37, %s38, %s39
      %p43 = pneg %p37
      %p44 = scmp.eq.s32.totalorder %s14, 3
      %p45 = por %p43, %p44
      %p46 = scmp.ne.s32.totalorder %s38, %s41
      %p47 = scmp.eq.s32.totalorder %s14, 0
      %p48 = por %p46, %p47
      %p49 = scmp.ne.s32.totalorder %s38, %s41
      %p50 = scmp.eq.s32.totalorder %s19, 3
      %p51 = por %p49, %p50
      %p52 = scmp.ne.s32.totalorder %s41, %s42
      %p53 = scmp.eq.s32.totalorder %s19, 0
      %p54 = por %p52, %p53
      %p55 = scmp.ne.s32.totalorder %s41, %s42
      %p56 = scmp.eq.s32.totalorder %s20, 3
      %p57 = por %p55, %p56
      %p59 = scmp.ne.s32.totalorder %s42, %s58
      %p60 = scmp.eq.s32.totalorder %s20, 0
      %p61 = por %p59, %p60
      %s63 = sadd.s32 %s62, 1
      %p66 = scmp.eq.s32.totalorder %s14, 3
      %p67 = scmp.ne.s32.totalorder %s62, %s64
      %p68 = scmp.eq.s32.totalorder %s14, 0
      %p69 = por %p67, %p68
      %p70 = scmp.ne.s32.totalorder %s62, %s64
      %p71 = scmp.eq.s32.totalorder %s19, 3
      %p72 = por %p70, %p71
      %p73 = scmp.ne.s32.totalorder %s64, %s65
      %p74 = scmp.eq.s32.totalorder %s19, 0
      %p75 = por %p73, %p74
      %p76 = scmp.ne.s32.totalorder %s64, %s65
      %p77 = scmp.eq.s32.totalorder %s20, 3
      %p78 = por %p76, %p77
      %p80 = scmp.ne.s32.totalorder %s65, %s79
      %p81 = scmp.eq.s32.totalorder %s20, 0
      %p82 = por %p80, %p81
      %s84 = sadd.s32 %s83, 1
      %p87 = scmp.eq.s32.totalorder %s14, 3
      %p88 = scmp.ne.s32.totalorder %s83, %s85
      %p89 = scmp.eq.s32.totalorder %s14, 0
      %p90 = por %p88, %p89
      %p91 = scmp.ne.s32.totalorder %s83, %s85
      %p92 = scmp.eq.s32.totalorder %s19, 3
      %p93 = por %p91, %p92
      %p94 = scmp.ne.s32.totalorder %s85, %s86
      %p95 = scmp.eq.s32.totalorder %s19, 0
      %p96 = por %p94, %p95
      %p97 = scmp.ne.s32.totalorder %s85, %s86
      %p98 = scmp.eq.s32.totalorder %s20, 3
      %p99 = por %p97, %p98
      %p101 = scmp.ne.s32.totalorder %s86, %s100
      %p102 = scmp.eq.s32.totalorder %s20, 0
      %p103 = por %p101, %p102
      %s105 = sadd.s32 %s104, 1
      %p108 = scmp.eq.s32.totalorder %s14, 3
      %p109 = scmp.ne.s32.totalorder %s104, %s106
      %p110 = scmp.eq.s32.totalorder %s14, 0
      %p111 = por %p109, %p110
      %p112 = scmp.ne.s32.totalorder %s104, %s106
      %p113 = scmp.eq.s32.totalorder %s19, 3
      %p114 = por %p112, %p113
      %p115 = scmp.ne.s32.totalorder %s106, %s107
      %p116 = scmp.eq.s32.totalorder %s19, 0
      %p117 = por %p115, %p116
      %p118 = scmp.ne.s32.totalorder %s106, %s107
      %p119 = scmp.eq.s32.totalorder %s20, 3
      %p120 = por %p118, %p119
      %p122 = scmp.ne.s32.totalorder %s107, %s121
      %p123 = scmp.eq.s32.totalorder %s20, 0
      %p124 = por %p122, %p123
      %s126 = sadd.s32 %s125, 1
      %p129 = scmp.eq.s32.totalorder %s14, 3
      %p130 = scmp.ne.s32.totalorder %s125, %s127
      %p131 = scmp.eq.s32.totalorder %s14, 0
      %p132 = por %p130, %p131
      %p133 = scmp.ne.s32.totalorder %s125, %s127
      %p134 = scmp.eq.s32.totalorder %s19, 3
      %p135 = por %p133, %p134
      %p136 = scmp.ne.s32.totalorder %s127, %s128
      %p137 = scmp.eq.s32.totalorder %s19, 0
      %p138 = por %p136, %p137
      %p139 = scmp.ne.s32.totalorder %s127, %s128
      %p140 = scmp.eq.s32.totalorder %s20, 3
      %p141 = por %p139, %p140
      %p143 = scmp.ne.s32.totalorder %s128, %s142
      %p144 = scmp.eq.s32.totalorder %s20, 0
      %p145 = por %p143, %p144
      %s146 = ssub.s32 %s21, %s33
      %p147 = scmp.eq.s32.totalorder %s146, 0
      %s149 = sadd.s32 %s148, 1
      %s150 = scalar_select %p147, %s148, %s149
      %p153 = pneg %p147
      %p154 = scmp.eq.s32.totalorder %s14, 3
      %p155 = por %p153, %p154
      %p156 = scmp.ne.s32.totalorder %s148, %s151
      %p157 = scmp.eq.s32.totalorder %s14, 0
      %p158 = por %p156, %p157
      %p159 = scmp.ne.s32.totalorder %s148, %s151
      %p160 = scmp.eq.s32.totalorder %s19, 3
      %p161 = por %p159, %p160
      %p162 = scmp.ne.s32.totalorder %s151, %s152
      %p163 = scmp.eq.s32.totalorder %s19, 0
      %p164 = por %p162, %p163
      %p165 = scmp.ne.s32.totalorder %s151, %s152
      %p166 = scmp.eq.s32.totalorder %s20, 3
      %p167 = por %p165, %p166
      %p169 = scmp.ne.s32.totalorder %s152, %s168
      %p170 = scmp.eq.s32.totalorder %s20, 0
      %p171 = por %p169, %p170
      %p172 = scmp.le.s32.totalorder 1, %s14
      %p173 = scmp.lt.s32.totalorder %s14, 5
      %p174 = pnand %p172, %p173
      %p175 = pneg %p174
      // Predicated region
      $region9: #{mvcnn_forward.1} parent=5 // pred_check
        _
      $region10: #{mvcnn_forward.1} parent=5 // pred_check_branch
        %177 = sbr.rel (%p174) target = $region12
      $region11: #{mvcnn_forward.1} parent=5 // pred_region
        %s178 = ssub.s32 %s14, 1
        // Predicated region
        $region13: #{mvcnn_forward.1} parent=11 // pred_check
          %p179 = pneg %p75
        $region14: #{mvcnn_forward.1} parent=11 // pred_check_branch
          %181 = sbr.rel (%p179) target = $region16
        $region15: #{mvcnn_forward.1} parent=11 // pred_region
          _
        $region16: #{mvcnn_forward.1} parent=11 // pred_fallthru
          _
        // Predicated region
        $region17: #{mvcnn_forward.1} parent=11 // pred_check
          %p182 = pneg %p96
        $region18: #{mvcnn_forward.1} parent=11 // pred_check_branch
          %184 = sbr.rel (%p182) target = $region20
        $region19: #{mvcnn_forward.1} parent=11 // pred_region
          _
        $region20: #{mvcnn_forward.1} parent=11 // pred_fallthru
          _
        // Predicated region
        $region21: #{mvcnn_forward.1} parent=11 // pred_check
          %p185 = pneg %p117
        $region22: #{mvcnn_forward.1} parent=11 // pred_check_branch
          %187 = sbr.rel (%p185) target = $region24
        $region23: #{mvcnn_forward.1} parent=11 // pred_region
          _
        $region24: #{mvcnn_forward.1} parent=11 // pred_fallthru
          _
        // Predicated region
        $region25: #{mvcnn_forward.1} parent=11 // pred_check
          %p188 = pneg %p138
        $region26: #{mvcnn_forward.1} parent=11 // pred_check_branch
          %190 = sbr.rel (%p188) target = $region28
        $region27: #{mvcnn_forward.1} parent=11 // pred_region
          _
        $region28: #{mvcnn_forward.1} parent=11 // pred_fallthru
          _
      $region12: #{mvcnn_forward.1} parent=5 // pred_fallthru
        _
      %p191 = scmp.lt.s32.totalorder %s14, 4
      // Predicated region
      $region29: #{mvcnn_forward.1} parent=5 // pred_check
        %p192 = pneg %p191
      $region30: #{mvcnn_forward.1} parent=5 // pred_check_branch
        %194 = sbr.rel (%p192) target = $region32
      $region31: #{mvcnn_forward.1} parent=5 // pred_region
        // Predicated region
        $region33: #{mvcnn_forward.1} parent=31 // pred_check
          %p195 = pneg %p48
        $region34: #{mvcnn_forward.1} parent=31 // pred_check_branch
          %197 = sbr.rel (%p195) target = $region36
        $region35: #{mvcnn_forward.1} parent=31 // pred_region
          %p198 = scmp.lt.s32.totalorder %s21, 1
          %s199 = scalar_select %p198, %s21, 1
          %p200 = scmp.lt.s32.totalorder %s22, 1
          %s201 = scalar_select %p200, %s22, 1
          %s202 = smul.addr %s201, 2
          %s203 = smul.addr %s199, 4
          %s204 = sadd.s32 %s202, %s203
          %s205 = smul.addr %s204, 4
          %s206 = scalar_lea.vmem %s0, %s205
        $region36: #{mvcnn_forward.1} parent=31 // pred_fallthru
          _
      $region32: #{mvcnn_forward.1} parent=5 // pred_fallthru
        _
      %p207 = scmp.le.s32.totalorder 1, %s14
      %p208 = scmp.lt.s32.totalorder %s14, 5
      %p209 = pnand %p207, %p208
      %p210 = pneg %p209
      // Predicated region
      $region37: #{mvcnn_forward.1} parent=5 // pred_check
        _
      $region38: #{mvcnn_forward.1} parent=5 // pred_check_branch
        %212 = sbr.rel (%p209) target = $region40
      $region39: #{mvcnn_forward.1} parent=5 // pred_region
        %s213 = ssub.s32 %s14, 1
        %p214 = scmp.lt.s32.totalorder %s23, 1
        %s215 = scalar_select %p214, %s23, 1
        %p216 = scmp.lt.s32.totalorder %s24, 1
        %s217 = scalar_select %p216, %s24, 1
        %s218 = smul.addr %s217, 2
        %s219 = smul.addr %s215, 4
        %s220 = sadd.s32 %s218, %s219
        %s221 = smul.addr %s220, 4
        %s222 = scalar_lea.vmem %s0, %s221
        %p223 = pneg %p54
        %p224 = pneg %p51
        %p225 = pneg %p75
        %p226 = pneg %p72
        %p227 = pneg %p96
        %p228 = pneg %p93
        %p229 = pneg %p117
        %p230 = pneg %p114
        %p231 = pneg %p138
        %p232 = pneg %p135
        %p233 = pneg %p164
        %p234 = pneg %p161
        %s235 = sand.u32 %s151, 1
        %s236 = scalar_lea.sflag [#allocation4], %s235
        %s237 = sand.u32 %s151, 1
        %s238 = scalar_lea.vmem [#allocation3], %s237
        %p239 = scmp.lt.s32.totalorder %s23, 1
        %s240 = scalar_select %p239, %s23, 1
        %p241 = scmp.lt.s32.totalorder %s24, 1
        %s242 = scalar_select %p241, %s24, 1
        %s243 = smul.addr %s242, 2
        %s244 = smul.addr %s240, 4
        %s245 = sadd.s32 %s243, %s244
        %s246 = smul.addr %s245, 4
        %s247 = scalar_lea.vmem %s0, %s246
        %v249 = vld [vmem:[%s247] sm:$0xff]
        %v251 = vcombine.high %v249, %v249
        %v253 = vpack.c.bf16 %v249, %v249
        %v254 = vpack.c.bf16 %v251, %v251
        %v255 = vld [vmem:[%s1] sm:$0xf]
        %v256 = vld [vmem:[%s1 + $0x4] sm:$0xf]
        %v257 = vld [vmem:[%s1 + $0x8] sm:$0xf]
        %v258 = vld [vmem:[%s1 + $0xc] sm:$0xf]
        %v259 = vld [vmem:[%s1 + $0x10] sm:$0xf]
        %v260 = vld [vmem:[%s1 + $0x14] sm:$0xf]
        %v261 = vld [vmem:[%s1 + $0x18] sm:$0xf]
        %v262 = vld [vmem:[%s1 + $0x1c] sm:$0xf]
        %v263 = vld [vmem:[%s1 + $0x20] sm:$0xf]
        %v264 = vld [vmem:[%s1 + $0x24] sm:$0xf]
        %v265 = vld [vmem:[%s1 + $0x28] sm:$0xf]
        %v266 = vld [vmem:[%s1 + $0x2c] sm:$0xf]
        %v267 = vld [vmem:[%s1 + $0x30] sm:$0xf]
        %v268 = vld [vmem:[%s1 + $0x34] sm:$0xf]
        %v269 = vld [vmem:[%s1 + $0x38] sm:$0xf]
        %v270 = vld [vmem:[%s1 + $0x3c] sm:$0xf]
        %v271 = vld [vmem:[%s2] sm:$0xff]
        %v272 = vld [vmem:[%s2 + $0x8] sm:$0xff]
        %v273 = vld [vmem:[%s2 + $0x10] sm:$0xff]
        %v274 = vld [vmem:[%s2 + $0x18] sm:$0xff]
        %v275 = vld [vmem:[%s2 + $0x20] sm:$0xff]
        %v276 = vld [vmem:[%s2 + $0x28] sm:$0xff]
        %v277 = vld [vmem:[%s2 + $0x30] sm:$0xff]
        %v278 = vld [vmem:[%s2 + $0x38] sm:$0xff]
        %v279 = vld [vmem:[%s2 + $0x40] sm:$0xff]
        %v280 = vld [vmem:[%s2 + $0x48] sm:$0xff]
        %v281 = vld [vmem:[%s2 + $0x50] sm:$0xff]
        %v282 = vld [vmem:[%s2 + $0x58] sm:$0xff]
        %v283 = vld [vmem:[%s2 + $0x60] sm:$0xff]
        %v284 = vld [vmem:[%s2 + $0x68] sm:$0xff]
        %v285 = vld [vmem:[%s2 + $0x70] sm:$0xff]
        %v286 = vld [vmem:[%s2 + $0x78] sm:$0xff]
        %288 = vset.pattern.permute.xlu0 0
        %289 = vperm.xlu0 %288, %v271
        %v290 = vpop.permute.xlu0 %289
        %293 = vset.pattern.permute.xlu0 0
        %294 = vperm.xlu0 %293, %v272
        %v295 = vpop.permute.xlu0 %294
        %298 = vset.pattern.permute.xlu0 0
        %299 = vperm.xlu0 %298, %v273
        %v300 = vpop.permute.xlu0 %299
        %303 = vset.pattern.permute.xlu0 0
        %304 = vperm.xlu0 %303, %v274
        %v305 = vpop.permute.xlu0 %304
        %308 = vset.pattern.permute.xlu0 0
        %309 = vperm.xlu0 %308, %v275
        %v310 = vpop.permute.xlu0 %309
        %313 = vset.pattern.permute.xlu0 0
        %314 = vperm.xlu0 %313, %v276
        %v315 = vpop.permute.xlu0 %314
        %318 = vset.pattern.permute.xlu0 0
        %319 = vperm.xlu0 %318, %v277
        %v320 = vpop.permute.xlu0 %319
        %323 = vset.pattern.permute.xlu0 0
        %324 = vperm.xlu0 %323, %v278
        %v325 = vpop.permute.xlu0 %324
        %328 = vset.pattern.permute.xlu0 0
        %329 = vperm.xlu0 %328, %v279
        %v330 = vpop.permute.xlu0 %329
        %333 = vset.pattern.permute.xlu0 0
        %334 = vperm.xlu0 %333, %v280
        %v335 = vpop.permute.xlu0 %334
        %338 = vset.pattern.permute.xlu0 0
        %339 = vperm.xlu0 %338, %v281
        %v340 = vpop.permute.xlu0 %339
        %343 = vset.pattern.permute.xlu0 0
        %344 = vperm.xlu0 %343, %v282
        %v345 = vpop.permute.xlu0 %344
        %348 = vset.pattern.permute.xlu0 0
        %349 = vperm.xlu0 %348, %v283
        %v350 = vpop.permute.xlu0 %349
        %353 = vset.pattern.permute.xlu0 0
        %354 = vperm.xlu0 %353, %v284
        %v355 = vpop.permute.xlu0 %354
        %358 = vset.pattern.permute.xlu0 0
        %359 = vperm.xlu0 %358, %v285
        %v360 = vpop.permute.xlu0 %359
        %363 = vset.pattern.permute.xlu0 0
        %364 = vperm.xlu0 %363, %v286
        %v365 = vpop.permute.xlu0 %364
        %v383 = vunpack.c.l.b16 %v255
        %v384 = vunpack.c.l.b16 %v256
        %v385 = vunpack.c.l.b16 %v257
        %v386 = vunpack.c.l.b16 %v258
        %v387 = vunpack.c.l.b16 %v259
        %v388 = vunpack.c.l.b16 %v260
        %v389 = vunpack.c.l.b16 %v261
        %v390 = vunpack.c.l.b16 %v262
        %v391 = vunpack.c.l.b16 %v263
        %v392 = vunpack.c.l.b16 %v264
        %v393 = vunpack.c.l.b16 %v265
        %v394 = vunpack.c.l.b16 %v266
        %v395 = vunpack.c.l.b16 %v267
        %v396 = vunpack.c.l.b16 %v268
        %v397 = vunpack.c.l.b16 %v269
        %v398 = vunpack.c.l.b16 %v270
        %v399 = vpack.c.b16 %v384, %v383
        %v400 = vpack.c.b16 %v386, %v385
        %v401 = vpack.c.b16 %v388, %v387
        %v402 = vpack.c.b16 %v390, %v389
        %v403 = vpack.c.b16 %v392, %v391
        %v404 = vpack.c.b16 %v394, %v393
        %v405 = vpack.c.b16 %v396, %v395
        %v406 = vpack.c.b16 %v398, %v397
        %vm407 = vcmask 31744
        %v409 = vsel %vm407, %v399, 0
        %v412 = vsel %vm407, %v400, 0
        %v415 = vsel %vm407, %v401, 0
        %v418 = vsel %vm407, %v402, 0
        %v421 = vsel %vm407, %v403, 0
        %v424 = vsel %vm407, %v404, 0
        %v427 = vsel %vm407, %v405, 0
        %v430 = vsel %vm407, %v406, 0
        %vm432 = vcmask 1041408
        %v434 = vsel %vm432, %v253, 0
        %v437 = vsel %vm432, %v254, 0
        %439 = vmatprep.subr.bf16.mxu0 %v437
        %440 = vmatpush1.bf16.msra.mxu0 %v434
        %441 = vmatprep.subr.bf16.mxu0 0
        %442 = vmatpush1.bf16.msra.mxu0 0
        %443 = vmatprep.subr.bf16.mxu0 0
        %444 = vmatpush1.bf16.msra.mxu0 0
        %445 = vmatprep.subr.bf16.mxu0 0
        %446 = vmatpush1.bf16.msra.mxu0 0
        %447 = vmatprep.subr.bf16.mxu0 0
        %448 = vmatpush1.bf16.msra.mxu0 0
        %449 = vmatprep.subr.bf16.mxu0 0
        %450 = vmatpush1.bf16.msra.mxu0 0
        %451 = vmatprep.subr.bf16.mxu0 0
        %452 = vmatpush1.bf16.msra.mxu0 0
        %453 = vmatprep.subr.bf16.mxu0 0
        %454 = vmatpush1.bf16.msra.mxu0 0
        %455 = vmatprep.subr.bf16.mxu0 0
        %456 = vmatpush1.bf16.msra.mxu0 0
        %457 = vmatprep.subr.bf16.mxu0 0
        %458 = vmatpush1.bf16.msra.mxu0 0
        %459 = vmatprep.subr.bf16.mxu0 0
        %460 = vmatpush1.bf16.msra.mxu0 0
        %461 = vmatprep.subr.bf16.mxu0 0
        %462 = vmatpush1.bf16.msra.mxu0 0
        %463 = vmatprep.subr.bf16.mxu0 0
        %464 = vmatpush1.bf16.msra.mxu0 0
        %465 = vmatprep.subr.bf16.mxu0 0
        %466 = vmatpush1.bf16.msra.mxu0 0
        %467 = vmatprep.subr.bf16.mxu0 0
        %468 = vmatpush1.bf16.msra.mxu0 0
        %469 = vmatprep.subr.bf16.mxu0 0
        %470 = vmatpush1.bf16.msra.mxu0 0
        %471 = vmatprep.mubr.bf16.mxu0 0
        %472 = vmatmul.mubr.bf16.gmra.mrb[0].mxu0 %v409
        %v473 = vpop.f32.mrb[0].mxu0
        %v474 = vadd.f32 %v290, %v473
        %v475 = vpop.f32.mrb[0].mxu0
        %v476 = vadd.f32 %v290, %v475
        %v477 = vpop.f32.mrb[0].mxu0
        %v478 = vadd.f32 %v295, %v477
        %v479 = vpop.f32.mrb[0].mxu0
        %v480 = vadd.f32 %v295, %v479
        %481 = vmatprep.mubr.bf16.mxu0 0
        %482 = vmatmul.mubr.bf16.gmra.mrb[0].mxu0 %v412
        %v483 = vpop.f32.mrb[0].mxu0
        %v484 = vadd.f32 %v300, %v483
        %v485 = vpop.f32.mrb[0].mxu0
        %v486 = vadd.f32 %v300, %v485
        %v487 = vpop.f32.mrb[0].mxu0
        %v488 = vadd.f32 %v305, %v487
        %v489 = vpop.f32.mrb[0].mxu0
        %v490 = vadd.f32 %v305, %v489
        %491 = vmatprep.mubr.bf16.mxu0 0
        %492 = vmatmul.mubr.bf16.gmra.mrb[0].mxu0 %v415
        %v493 = vpop.f32.mrb[0].mxu0
        %v494 = vadd.f32 %v310, %v493
        %v495 = vpop.f32.mrb[0].mxu0
        %v496 = vadd.f32 %v310, %v495
        %v497 = vpop.f32.mrb[0].mxu0
        %v498 = vadd.f32 %v315, %v497
        %v499 = vpop.f32.mrb[0].mxu0
        %v500 = vadd.f32 %v315, %v499
        %501 = vmatprep.mubr.bf16.mxu0 0
        %502 = vmatmul.mubr.bf16.gmra.mrb[0].mxu0 %v418
        %v503 = vpop.f32.mrb[0].mxu0
        %v504 = vadd.f32 %v320, %v503
        %v505 = vpop.f32.mrb[0].mxu0
        %v506 = vadd.f32 %v320, %v505
        %v507 = vpop.f32.mrb[0].mxu0
        %v508 = vadd.f32 %v325, %v507
        %v509 = vpop.f32.mrb[0].mxu0
        %v510 = vadd.f32 %v325, %v509
        %511 = vmatprep.mubr.bf16.mxu0 0
        %512 = vmatmul.mubr.bf16.gmra.mrb[0].mxu0 %v421
        %v513 = vpop.f32.mrb[0].mxu0
        %v514 = vadd.f32 %v330, %v513
        %v515 = vpop.f32.mrb[0].mxu0
        %v516 = vadd.f32 %v330, %v515
        %v517 = vpop.f32.mrb[0].mxu0
        %v518 = vadd.f32 %v335, %v517
        %v519 = vpop.f32.mrb[0].mxu0
        %v520 = vadd.f32 %v335, %v519
        %521 = vmatprep.mubr.bf16.mxu0 0
        %522 = vmatmul.mubr.bf16.gmra.mrb[0].mxu0 %v424
        %v523 = vpop.f32.mrb[0].mxu0
        %v524 = vadd.f32 %v340, %v523
        %v525 = vpop.f32.mrb[0].mxu0
        %v526 = vadd.f32 %v340, %v525
        %v527 = vpop.f32.mrb[0].mxu0
        %v528 = vadd.f32 %v345, %v527
        %v529 = vpop.f32.mrb[0].mxu0
        %v530 = vadd.f32 %v345, %v529
        %531 = vmatprep.mubr.bf16.mxu0 0
        %532 = vmatmul.mubr.bf16.gmra.mrb[0].mxu0 %v427
        %v533 = vpop.f32.mrb[0].mxu0
        %v534 = vadd.f32 %v350, %v533
        %v535 = vpop.f32.mrb[0].mxu0
        %v536 = vadd.f32 %v350, %v535
        %v537 = vpop.f32.mrb[0].mxu0
        %v538 = vadd.f32 %v355, %v537
        %v539 = vpop.f32.mrb[0].mxu0
        %v540 = vadd.f32 %v355, %v539
        %541 = vmatprep.mubr.bf16.mxu0 0
        %542 = vmatmul.mubr.bf16.gmra.mrb[0].mxu0 %v430
        %v543 = vpop.f32.mrb[0].mxu0
        %v544 = vadd.f32 %v360, %v543
        %v545 = vpop.f32.mrb[0].mxu0
        %v546 = vadd.f32 %v360, %v545
        %v547 = vpop.f32.mrb[0].mxu0
        %v548 = vadd.f32 %v365, %v547
        %v549 = vpop.f32.mrb[0].mxu0
        %v550 = vadd.f32 %v365, %v549
        %551 = vdwg.mxu0
        %v552 = vmax.f32 %v474, 0.0
        %v553 = vmax.f32 %v476, 0.0
        %v554 = vmax.f32 %v478, 0.0
        %v555 = vmax.f32 %v480, 0.0
        %v556 = vmax.f32 %v484, 0.0
        %v557 = vmax.f32 %v486, 0.0
        %v558 = vmax.f32 %v488, 0.0
        %v559 = vmax.f32 %v490, 0.0
        %v560 = vmax.f32 %v494, 0.0
        %v561 = vmax.f32 %v496, 0.0
        %v562 = vmax.f32 %v498, 0.0
        %v563 = vmax.f32 %v500, 0.0
        %v564 = vmax.f32 %v504, 0.0
        %v565 = vmax.f32 %v506, 0.0
        %v566 = vmax.f32 %v508, 0.0
        %v567 = vmax.f32 %v510, 0.0
        %v568 = vmax.f32 %v514, 0.0
        %v569 = vmax.f32 %v516, 0.0
        %v570 = vmax.f32 %v518, 0.0
        %v571 = vmax.f32 %v520, 0.0
        %v572 = vmax.f32 %v524, 0.0
        %v573 = vmax.f32 %v526, 0.0
        %v574 = vmax.f32 %v528, 0.0
        %v575 = vmax.f32 %v530, 0.0
        %v576 = vmax.f32 %v534, 0.0
        %v577 = vmax.f32 %v536, 0.0
        %v578 = vmax.f32 %v538, 0.0
        %v579 = vmax.f32 %v540, 0.0
        %v580 = vmax.f32 %v544, 0.0
        %v581 = vmax.f32 %v546, 0.0
        %v582 = vmax.f32 %v548, 0.0
        %v583 = vmax.f32 %v550, 0.0
        %v584 = vadd.f32 %v552, %v553
        %585 = vadd.xlane.f32.xlu0 %v584
        %v586 = vpop.xlane.xlu0 %585
        %v587 = vadd.f32 %v554, %v555
        %588 = vadd.xlane.f32.xlu0 %v587
        %v589 = vpop.xlane.xlu0 %588
        %v590 = vadd.f32 %v556, %v557
        %591 = vadd.xlane.f32.xlu0 %v590
        %v592 = vpop.xlane.xlu0 %591
        %v593 = vadd.f32 %v558, %v559
        %594 = vadd.xlane.f32.xlu0 %v593
        %v595 = vpop.xlane.xlu0 %594
        %v596 = vadd.f32 %v560, %v561
        %597 = vadd.xlane.f32.xlu0 %v596
        %v598 = vpop.xlane.xlu0 %597
        %v599 = vadd.f32 %v562, %v563
        %600 = vadd.xlane.f32.xlu0 %v599
        %v601 = vpop.xlane.xlu0 %600
        %v602 = vadd.f32 %v564, %v565
        %603 = vadd.xlane.f32.xlu0 %v602
        %v604 = vpop.xlane.xlu0 %603
        %v605 = vadd.f32 %v566, %v567
        %606 = vadd.xlane.f32.xlu0 %v605
        %v607 = vpop.xlane.xlu0 %606
        %v608 = vadd.f32 %v568, %v569
        %609 = vadd.xlane.f32.xlu0 %v608
        %v610 = vpop.xlane.xlu0 %609
        %v611 = vadd.f32 %v570, %v571
        %612 = vadd.xlane.f32.xlu0 %v611
        %v613 = vpop.xlane.xlu0 %612
        %v614 = vadd.f32 %v572, %v573
        %615 = vadd.xlane.f32.xlu0 %v614
        %v616 = vpop.xlane.xlu0 %615
        %v617 = vadd.f32 %v574, %v575
        %618 = vadd.xlane.f32.xlu0 %v617
        %v619 = vpop.xlane.xlu0 %618
        %v620 = vadd.f32 %v576, %v577
        %621 = vadd.xlane.f32.xlu0 %v620
        %v622 = vpop.xlane.xlu0 %621
        %v623 = vadd.f32 %v578, %v579
        %624 = vadd.xlane.f32.xlu0 %v623
        %v625 = vpop.xlane.xlu0 %624
        %v626 = vadd.f32 %v580, %v581
        %627 = vadd.xlane.f32.xlu0 %v626
        %v628 = vpop.xlane.xlu0 %627
        %v629 = vadd.f32 %v582, %v583
        %630 = vadd.xlane.f32.xlu0 %v629
        %v631 = vpop.xlane.xlu0 %630
        %v632 = vmul.f32 %v586, 0.00390625
        %v633 = vmul.f32 %v589, 0.00390625
        %v634 = vmul.f32 %v592, 0.00390625
        %v635 = vmul.f32 %v595, 0.00390625
        %v636 = vmul.f32 %v598, 0.00390625
        %v637 = vmul.f32 %v601, 0.00390625
        %v638 = vmul.f32 %v604, 0.00390625
        %v639 = vmul.f32 %v607, 0.00390625
        %v640 = vmul.f32 %v610, 0.00390625
        %v641 = vmul.f32 %v613, 0.00390625
        %v642 = vmul.f32 %v616, 0.00390625
        %v643 = vmul.f32 %v619, 0.00390625
        %v644 = vmul.f32 %v622, 0.00390625
        %v645 = vmul.f32 %v625, 0.00390625
        %v646 = vmul.f32 %v628, 0.00390625
        %v647 = vmul.f32 %v631, 0.00390625
        %p648 = scmp.eq.s32.totalorder %s24, 0
        // Predicated region
        $region41: #{mvcnn_forward.1} parent=39 // pred_check
          %p649 = pneg %p648
        $region42: #{mvcnn_forward.1} parent=39 // pred_check_branch
          %651 = sbr.rel (%p649) target = $region44
        $region43: #{mvcnn_forward.1} parent=39 // pred_region
          %vm652 = vcmask 7168
          %653 = vst.msk [vmem:[#allocation2] sm:$0xff] %vm652, %v632
          %654 = vst.msk [vmem:[#allocation2 + $0x8] sm:$0xff] %vm652, %v633
          %655 = vst.msk [vmem:[#allocation2 + $0x10] sm:$0xff] %vm652, %v634
          %656 = vst.msk [vmem:[#allocation2 + $0x18] sm:$0xff] %vm652, %v635
          %657 = vst.msk [vmem:[#allocation2 + $0x20] sm:$0xff] %vm652, %v636
          %658 = vst.msk [vmem:[#allocation2 + $0x28] sm:$0xff] %vm652, %v637
          %659 = vst.msk [vmem:[#allocation2 + $0x30] sm:$0xff] %vm652, %v638
          %660 = vst.msk [vmem:[#allocation2 + $0x38] sm:$0xff] %vm652, %v639
          %661 = vst.msk [vmem:[#allocation2 + $0x40] sm:$0xff] %vm652, %v640
          %662 = vst.msk [vmem:[#allocation2 + $0x48] sm:$0xff] %vm652, %v641
          %663 = vst.msk [vmem:[#allocation2 + $0x50] sm:$0xff] %vm652, %v642
          %664 = vst.msk [vmem:[#allocation2 + $0x58] sm:$0xff] %vm652, %v643
          %665 = vst.msk [vmem:[#allocation2 + $0x60] sm:$0xff] %vm652, %v644
          %666 = vst.msk [vmem:[#allocation2 + $0x68] sm:$0xff] %vm652, %v645
          %667 = vst.msk [vmem:[#allocation2 + $0x70] sm:$0xff] %vm652, %v646
          %668 = vst.msk [vmem:[#allocation2 + $0x78] sm:$0xff] %vm652, %v647
        $region44: #{mvcnn_forward.1} parent=39 // pred_fallthru
          _
        %p669 = scmp.gt.s32.totalorder %s24, 0
        // Predicated region
        $region45: #{mvcnn_forward.1} parent=39 // pred_check
          %p670 = pneg %p669
        $region46: #{mvcnn_forward.1} parent=39 // pred_check_branch
          %672 = sbr.rel (%p670) target = $region48
        $region47: #{mvcnn_forward.1} parent=39 // pred_region
          %v673 = vld [vmem:[#allocation2] sm:$0xff]
          %v674 = vld [vmem:[#allocation2 + $0x8] sm:$0xff]
          %v675 = vld [vmem:[#allocation2 + $0x10] sm:$0xff]
          %v676 = vld [vmem:[#allocation2 + $0x18] sm:$0xff]
          %v677 = vld [vmem:[#allocation2 + $0x20] sm:$0xff]
          %v678 = vld [vmem:[#allocation2 + $0x28] sm:$0xff]
          %v679 = vld [vmem:[#allocation2 + $0x30] sm:$0xff]
          %v680 = vld [vmem:[#allocation2 + $0x38] sm:$0xff]
          %v681 = vld [vmem:[#allocation2 + $0x40] sm:$0xff]
          %v682 = vld [vmem:[#allocation2 + $0x48] sm:$0xff]
          %v683 = vld [vmem:[#allocation2 + $0x50] sm:$0xff]
          %v684 = vld [vmem:[#allocation2 + $0x58] sm:$0xff]
          %v685 = vld [vmem:[#allocation2 + $0x60] sm:$0xff]
          %v686 = vld [vmem:[#allocation2 + $0x68] sm:$0xff]
          %v687 = vld [vmem:[#allocation2 + $0x70] sm:$0xff]
          %v688 = vld [vmem:[#allocation2 + $0x78] sm:$0xff]
          %v689 = vmax.f32 %v673, %v632
          %v690 = vmax.f32 %v674, %v633
          %v691 = vmax.f32 %v675, %v634
          %v692 = vmax.f32 %v676, %v635
          %v693 = vmax.f32 %v677, %v636
          %v694 = vmax.f32 %v678, %v637
          %v695 = vmax.f32 %v679, %v638
          %v696 = vmax.f32 %v680, %v639
          %v697 = vmax.f32 %v681, %v640
          %v698 = vmax.f32 %v682, %v641
          %v699 = vmax.f32 %v683, %v642
          %v700 = vmax.f32 %v684, %v643
          %v701 = vmax.f32 %v685, %v644
          %v702 = vmax.f32 %v686, %v645
          %v703 = vmax.f32 %v687, %v646
          %v704 = vmax.f32 %v688, %v647
          %vm705 = vcmask 7168
          %706 = vst.msk [vmem:[#allocation2] sm:$0xff] %vm705, %v689
          %707 = vst.msk [vmem:[#allocation2 + $0x8] sm:$0xff] %vm705, %v690
          %708 = vst.msk [vmem:[#allocation2 + $0x10] sm:$0xff] %vm705, %v691
          %709 = vst.msk [vmem:[#allocation2 + $0x18] sm:$0xff] %vm705, %v692
          %710 = vst.msk [vmem:[#allocation2 + $0x20] sm:$0xff] %vm705, %v693
          %711 = vst.msk [vmem:[#allocation2 + $0x28] sm:$0xff] %vm705, %v694
          %712 = vst.msk [vmem:[#allocation2 + $0x30] sm:$0xff] %vm705, %v695
          %713 = vst.msk [vmem:[#allocation2 + $0x38] sm:$0xff] %vm705, %v696
          %714 = vst.msk [vmem:[#allocation2 + $0x40] sm:$0xff] %vm705, %v697
          %715 = vst.msk [vmem:[#allocation2 + $0x48] sm:$0xff] %vm705, %v698
          %716 = vst.msk [vmem:[#allocation2 + $0x50] sm:$0xff] %vm705, %v699
          %717 = vst.msk [vmem:[#allocation2 + $0x58] sm:$0xff] %vm705, %v700
          %718 = vst.msk [vmem:[#allocation2 + $0x60] sm:$0xff] %vm705, %v701
          %719 = vst.msk [vmem:[#allocation2 + $0x68] sm:$0xff] %vm705, %v702
          %720 = vst.msk [vmem:[#allocation2 + $0x70] sm:$0xff] %vm705, %v703
          %721 = vst.msk [vmem:[#allocation2 + $0x78] sm:$0xff] %vm705, %v704
        $region48: #{mvcnn_forward.1} parent=39 // pred_fallthru
          _
        %p722 = scmp.eq.s32.totalorder %s24, 1
        // Predicated region
        $region49: #{mvcnn_forward.1} parent=39 // pred_check
          %p723 = pneg %p722
        $region50: #{mvcnn_forward.1} parent=39 // pred_check_branch
          %725 = sbr.rel (%p723) target = $region52
        $region51: #{mvcnn_forward.1} parent=39 // pred_region
          %v726 = vld [vmem:[#allocation2] sm:$0xff]
          %v727 = vld [vmem:[#allocation2 + $0x8] sm:$0xff]
          %v728 = vld [vmem:[#allocation2 + $0x10] sm:$0xff]
          %v729 = vld [vmem:[#allocation2 + $0x18] sm:$0xff]
          %v730 = vld [vmem:[#allocation2 + $0x20] sm:$0xff]
          %v731 = vld [vmem:[#allocation2 + $0x28] sm:$0xff]
          %v732 = vld [vmem:[#allocation2 + $0x30] sm:$0xff]
          %v733 = vld [vmem:[#allocation2 + $0x38] sm:$0xff]
          %v734 = vld [vmem:[#allocation2 + $0x40] sm:$0xff]
          %v735 = vld [vmem:[#allocation2 + $0x48] sm:$0xff]
          %v736 = vld [vmem:[#allocation2 + $0x50] sm:$0xff]
          %v737 = vld [vmem:[#allocation2 + $0x58] sm:$0xff]
          %v738 = vld [vmem:[#allocation2 + $0x60] sm:$0xff]
          %v739 = vld [vmem:[#allocation2 + $0x68] sm:$0xff]
          %v740 = vld [vmem:[#allocation2 + $0x70] sm:$0xff]
          %v741 = vld [vmem:[#allocation2 + $0x78] sm:$0xff]
          %v742 = vpack.c.bf16 %v727, %v726
          %v743 = vpack.c.bf16 %v729, %v728
          %v744 = vpack.c.bf16 %v731, %v730
          %v745 = vpack.c.bf16 %v733, %v732
          %v746 = vpack.c.bf16 %v735, %v734
          %v747 = vpack.c.bf16 %v737, %v736
          %v748 = vpack.c.bf16 %v739, %v738
          %v749 = vpack.c.bf16 %v741, %v740
          %v750 = vld [vmem:[%s3] sm:$0xf]
          %v751 = vld [vmem:[%s3 + $0x4] sm:$0xf]
          %v752 = vld [vmem:[%s3 + $0x8] sm:$0xf]
          %v753 = vld [vmem:[%s3 + $0xc] sm:$0xf]
          %v754 = vld [vmem:[%s4] sm:$0xff]
          %v755 = vld [vmem:[%s4 + $0x8] sm:$0xff]
          %v756 = vld [vmem:[%s4 + $0x10] sm:$0xff]
          %v757 = vld [vmem:[%s4 + $0x18] sm:$0xff]
          %v762 = vunpack.c.l.b16 %v750
          %v763 = vunpack.c.l.b16 %v751
          %v764 = vunpack.c.l.b16 %v752
          %v765 = vunpack.c.l.b16 %v753
          %v766 = vpack.c.b16 %v763, %v762
          %v767 = vpack.c.b16 %v765, %v764
          %770 = vmatprep.subr.bf16.mxu0 0
          %771 = vmatpush1.bf16.msra.mxu0 %v742
          %772 = vmatprep.subr.bf16.mxu0 0
          %773 = vmatpush1.bf16.msra.mxu0 %v743
          %774 = vmatprep.subr.bf16.mxu0 0
          %775 = vmatpush1.bf16.msra.mxu0 %v744
          %776 = vmatprep.subr.bf16.mxu0 0
          %777 = vmatpush1.bf16.msra.mxu0 %v745
          %778 = vmatprep.subr.bf16.mxu0 0
          %779 = vmatpush1.bf16.msra.mxu0 %v746
          %780 = vmatprep.subr.bf16.mxu0 0
          %781 = vmatpush1.bf16.msra.mxu0 %v747
          %782 = vmatprep.subr.bf16.mxu0 0
          %783 = vmatpush1.bf16.msra.mxu0 %v748
          %784 = vmatprep.subr.bf16.mxu0 0
          %785 = vmatpush1.bf16.msra.mxu0 %v749
          %786 = vmatprep.subr.bf16.mxu0 0
          %787 = vmatpush1.bf16.msra.mxu0 0
          %788 = vmatprep.subr.bf16.mxu0 0
          %789 = vmatpush1.bf16.msra.mxu0 0
          %790 = vmatprep.subr.bf16.mxu0 0
          %791 = vmatpush1.bf16.msra.mxu0 0
          %792 = vmatprep.subr.bf16.mxu0 0
          %793 = vmatpush1.bf16.msra.mxu0 0
          %794 = vmatprep.subr.bf16.mxu0 0
          %795 = vmatpush1.bf16.msra.mxu0 0
          %796 = vmatprep.subr.bf16.mxu0 0
          %797 = vmatpush1.bf16.msra.mxu0 0
          %798 = vmatprep.subr.bf16.mxu0 0
          %799 = vmatpush1.bf16.msra.mxu0 0
          %800 = vmatprep.subr.bf16.mxu0 0
          %801 = vmatpush1.bf16.msra.mxu0 0
          %802 = vmatprep.mubr.bf16.mxu0 0
          %803 = vmatmul.mubr.bf16.gmra.mrb[0].mxu0 %v766
          %v804 = vpop.f32.mrb[0].mxu0
          %v805 = vadd.f32 %v754, %v804
          %v806 = vpop.f32.mrb[0].mxu0
          %v807 = vpop.f32.mrb[0].mxu0
          %v808 = vadd.f32 %v755, %v807
          %v809 = vpop.f32.mrb[0].mxu0
          %810 = vmatprep.mubr.bf16.mxu0 0
          %811 = vmatmul.mubr.bf16.gmra.mrb[0].mxu0 %v767
          %v812 = vpop.f32.mrb[0].mxu0
          %v813 = vadd.f32 %v756, %v812
          %v814 = vpop.f32.mrb[0].mxu0
          %v815 = vpop.f32.mrb[0].mxu0
          %v816 = vadd.f32 %v757, %v815
          %v817 = vpop.f32.mrb[0].mxu0
          %818 = vdwg.mxu0
          %819 = vxpose.xlu0.b32.start [1/16] %v805, 128
          %820 = vxpose.xlu0.b32.cont [2/16] %v808, 128
          %821 = vxpose.xlu0.b32.cont [3/16] %v813, 128
          %822 = vxpose.xlu0.b32.cont [4/16] %v816, 128
          %823 = vxpose.xlu0.b32.cont [5/16] 0.0, 128
          %824 = vxpose.xlu0.b32.cont [6/16] 0.0, 128
          %825 = vxpose.xlu0.b32.cont [7/16] 0.0, 128
          %826 = vxpose.xlu0.b32.cont [8/16] 0.0, 128
          %827 = vxpose.xlu0.b32.cont [9/16] 0.0, 128
          %828 = vxpose.xlu0.b32.cont [10/16] 0.0, 128
          %829 = vxpose.xlu0.b32.cont [11/16] 0.0, 128
          %830 = vxpose.xlu0.b32.cont [12/16] 0.0, 128
          %831 = vxpose.xlu0.b32.cont [13/16] 0.0, 128
          %832 = vxpose.xlu0.b32.cont [14/16] 0.0, 128
          %833 = vxpose.xlu0.b32.cont [15/16] 0.0, 128
          %834 = vxpose.xlu0.b32.end [16/16] 0.0, 128
          %v835 = vpop.trf.xlu0
          %v836 = vpop.trf.xlu0
          %v837 = vpop.trf.xlu0
          %v838 = vpop.trf.xlu0
          %v839 = vpop.trf.xlu0
          %v840 = vpop.trf.xlu0
          %v841 = vpop.trf.xlu0
          %v842 = vpop.trf.xlu0
          %v843 = vpop.trf.xlu0
          %v844 = vpop.trf.xlu0
          %v845 = vpop.trf.xlu0
          %v846 = vpop.trf.xlu0
          %v847 = vpop.trf.xlu0
          %v848 = vpop.trf.xlu0
          %v849 = vpop.trf.xlu0
          %v850 = vpop.trf.xlu0
          %vm851 = vcmask 253952
          %852 = vst.msk [vmem:[%s238] sm:$0x1] %vm851, %v835
        $region52: #{mvcnn_forward.1} parent=39 // pred_fallthru
          _
        %s853 = sand.u32 %s151, 1
        %s854 = scalar_lea.sflag [#allocation4], %s853
        %s855 = sand.u32 %s151, 1
        %s856 = scalar_lea.vmem [#allocation3], %s855
        // Predicated region
        $region53: #{mvcnn_forward.1} parent=39 // pred_check
          %p857 = pneg %p161
        $region54: #{mvcnn_forward.1} parent=39 // pred_check_branch
          %859 = sbr.rel (%p857) target = $region56
        $region55: #{mvcnn_forward.1} parent=39 // pred_region
          %s861 = ssub.s32 16, 16
          %862 = vsyncadd %s854, %s861
          %s863 = smul.addr %s23, 16
          %s864 = scalar_lea.hbm %s5, %s863
          %s866 = sshll.u32 %s856, 4
          %s867 = int_to_ptr.vmem [resolvable:$true] %s866
          %869 = dma.vmem_to_hbm [thread:$0]  %s867, 16, %s864, %s854
        $region56: #{mvcnn_forward.1} parent=39 // pred_fallthru
          _
      $region40: #{mvcnn_forward.1} parent=5 // pred_fallthru
        _
      %p870 = scmp.le.s32.totalorder 2, %s14
      // Predicated region
      $region57: #{mvcnn_forward.1} parent=5 // pred_check
        %p871 = pneg %p870
      $region58: #{mvcnn_forward.1} parent=5 // pred_check_branch
        %873 = sbr.rel (%p871) target = $region60
      $region59: #{mvcnn_forward.1} parent=5 // pred_region
        %s874 = ssub.s32 %s14, 2
        // Predicated region
        $region61: #{mvcnn_forward.1} parent=59 // pred_check
          %p875 = pneg %p167
        $region62: #{mvcnn_forward.1} parent=59 // pred_check_branch
          %877 = sbr.rel (%p875) target = $region64
        $region63: #{mvcnn_forward.1} parent=59 // pred_region
          %s878 = sand.u32 %s152, 1
          %s879 = scalar_lea.sflag [#allocation4], %s878
          %s880 = sand.u32 %s152, 1
          %s881 = scalar_lea.vmem [#allocation3], %s880
          %882 = dma.done %s879, 16
        $region64: #{mvcnn_forward.1} parent=59 // pred_fallthru
          _
      $region60: #{mvcnn_forward.1} parent=5 // pred_fallthru
        _
    $region6: #{mvcnn_forward.1} parent=1 // loop_footer
      %s18 = sadd.s32 1, %s14
    $region7: #{mvcnn_forward.1} parent=1 // loop_footer_branch
      %13 = sbr.rel target = $region3
    $region8: #{mvcnn_forward.1} parent=1 // loop_exit
      _
    %883 = vsyncpa [#allocation4], 1
    %s884 = scalar_lea.sflag [#allocation4], 1
    %885 = vsyncpa %s884, 1

</llo_original>
